<compile_context>
chip_gen: v7x
topology: tpu7x:2x2x1
jax: 0.10.0
libtpu: 0.0.40
codegen_flags: <defaults>
</compile_context>

<pallas_src>
import functools

import jax
import jax.numpy as jnp
from jax.experimental import pallas as pl
from jax.experimental.pallas import tpu as pltpu


VGG19_MEAN = jnp.array([0.485, 0.456, 0.406], dtype=jnp.float32)
VGG19_STD = jnp.array([0.229, 0.224, 0.225], dtype=jnp.float32)


# ----------------------------------------------------------------------------
# Kernels
# ----------------------------------------------------------------------------
def _row_norm_sum_kernel_single(x_ref, y_ref, o_ref, *, use_l1):
    """Single hw-block case: grid (num_m,).  No scratch, direct output write."""
    d = x_ref[...].astype(jnp.float32) - y_ref[...].astype(jnp.float32)
    contrib = jnp.abs(d) if use_l1 else d * d
    o_ref[...] = jnp.sum(contrib, axis=-1, keepdims=True)


def _row_norm_sum_kernel_multi(x_ref, y_ref, o_ref, acc_ref, *, hw, t_hw, use_l1):
    """Multi hw-block case: grid (num_m, num_k), k is the reduction axis.

    acc_ref is a small (bm, 128) f32 accumulator.  Each step folds the
    (bm, t_hw) contribution down to 128 lanes with static 128-lane slices
    (pure VPU adds); the final cross-lane reduce + output write happen only
    on the last k step.
    """
    k = pl.program_id(1)

    @pl.when(k == 0)
    def _():
        acc_ref[...] = jnp.zeros_like(acc_ref)

    d = x_ref[...].astype(jnp.float32) - y_ref[...].astype(jnp.float32)
    contrib = jnp.abs(d) if use_l1 else d * d

    # Only emitted when H*W is not a multiple of the lane tile: mask the tail
    # of the last partial block (OOB lanes contain garbage for x and y).
    if hw % t_hw != 0:
        col = jax.lax.broadcasted_iota(jnp.int32, contrib.shape, 1) + k * t_hw
        contrib = jnp.where(col < hw, contrib, 0.0)

    # Fold t_hw lanes down to 128 with static slices (t_hw % 128 == 0 here).
    n_sub = t_hw // 128
    s = contrib[:, 0:128]
    for j in range(1, n_sub):
        s = s + contrib[:, j * 128:(j + 1) * 128]
    acc_ref[...] += s

    @pl.when(k == pl.num_programs(1) - 1)
    def _():
        o_ref[...] = jnp.sum(acc_ref[...], axis=-1, keepdims=True)


# ----------------------------------------------------------------------------
# Pallas wrapper: per-row sum over HW of (x-y)^2 or |x-y|
# ----------------------------------------------------------------------------
def _rowwise_norm_sum_pallas(x2, y2, *, use_l1=False):
    """x2, y2: (M, HW). Returns f32 (M,) with sum over HW of (x-y)^2 or |x-y|."""
    assert x2.shape == y2.shape and x2.ndim == 2
    m, hw = x2.shape
    itemsize = jnp.dtype(x2.dtype).itemsize
    # Sublane pack factor: rows per sublane group for the input dtype.
    row_pack = {4: 8, 2: 16, 1: 32}.get(itemsize, 8)

    # Generation-aware per-input block budget (v7x has only 64 MiB VMEM/TC).
    try:
        vmem_cap = int(pltpu.get_tpu_info().vmem_capacity_bytes)
    except Exception:
        vmem_cap = 64 << 20  # conservative (v7x-safe) default
    block_bytes_target = (4 << 20) if vmem_cap <= (64 << 20) else (8 << 20)

    # Lane tile: full HW when it fits; else a large multiple of 128 (bounded
    # so the in-kernel static-slice unroll stays modest).
    max_lane_bytes = 32 << 10                       # 32 KiB per row per input
    max_lanes = (max_lane_bytes // itemsize) // 128 * 128   # 8192 f32 / 16384 bf16
    if hw <= max_lanes:
        t_hw = hw
        num_k = 1
    else:
        t_hw = max_lanes
        num_k = pl.cdiv(hw, t_hw)
    lanes_padded = ((t_hw + 127) // 128) * 128

    # Row tile: as many rows as fit the per-input byte budget, rounded to the
    # dtype pack factor; keep >= 2 row blocks (megacore) whenever m allows.
    bm_cap = max(row_pack,
                 (block_bytes_target // (lanes_padded * itemsize))
                 // row_pack * row_pack)
    if m <= row_pack:
        bm = m                                       # full extent, single block
    else:
        half = -(-m // 2)
        half_r = -(-half // row_pack) * row_pack
        bm = max(row_pack, min(bm_cap, half_r))
    num_m = pl.cdiv(m, bm)

    # Explicit scoped-VMEM budget: 2 inputs x 2 pipeline buffers x block
    # + (bm,128) accumulator + output buffers + slack.
    block_in_bytes = bm * lanes_padded * itemsize
    acc_bytes = (bm * 128 * 4) if num_k > 1 else 0
    vmem_limit = 2 * 2 * block_in_bytes + acc_bytes + 2 * bm * 128 * 4 + (2 << 20)
    vmem_limit = int(min(max(vmem_limit, 16 << 20), max(16 << 20, vmem_cap // 2)))

    cost = pl.CostEstimate(
        flops=3 * m * hw,
        transcendentals=0,
        bytes_accessed=2 * m * hw * itemsize + m * 4,
    )

    if num_k == 1:
        kernel = functools.partial(_row_norm_sum_kernel_single, use_l1=use_l1)
        out = pl.pallas_call(
            kernel,
            out_shape=jax.ShapeDtypeStruct((m, 1), jnp.float32),
            grid_spec=pltpu.PrefetchScalarGridSpec(
                num_scalar_prefetch=0,
                grid=(num_m,),
                in_specs=[
                    pl.BlockSpec((bm, t_hw), lambda i: (i, 0)),
                    pl.BlockSpec((bm, t_hw), lambda i: (i, 0)),
                ],
                out_specs=pl.BlockSpec((bm, 1), lambda i: (i, 0)),
            ),
            compiler_params=pltpu.CompilerParams(
                dimension_semantics=("parallel",),
                vmem_limit_bytes=vmem_limit,
            ),
            cost_estimate=cost,
        )(x2, y2)
    else:
        kernel = functools.partial(_row_norm_sum_kernel_multi,
                                   hw=hw, t_hw=t_hw, use_l1=use_l1)
        out = pl.pallas_call(
            kernel,
            out_shape=jax.ShapeDtypeStruct((m, 1), jnp.float32),
            grid_spec=pltpu.PrefetchScalarGridSpec(
                num_scalar_prefetch=0,
                grid=(num_m, num_k),
                in_specs=[
                    pl.BlockSpec((bm, t_hw), lambda i, k: (i, k)),
                    pl.BlockSpec((bm, t_hw), lambda i, k: (i, k)),
                ],
                out_specs=pl.BlockSpec((bm, 1), lambda i, k: (i, 0)),
                scratch_shapes=[pltpu.VMEM((bm, 128), jnp.float32)],
            ),
            compiler_params=pltpu.CompilerParams(
                dimension_semantics=("parallel", "arbitrary"),
                vmem_limit_bytes=vmem_limit,
            ),
            cost_estimate=cost,
        )(x2, y2)
    return out[:, 0]


def _rowwise_norm_sum_jnp(x2, y2, *, use_l1=False):
    """Tiny-input fallback: fused XLA reduce beats pallas_call fixed cost."""
    d = x2.astype(jnp.float32) - y2.astype(jnp.float32)
    v = jnp.abs(d) if use_l1 else d * d
    return jnp.sum(v, axis=1)


# ----------------------------------------------------------------------------
# Public forward
# ----------------------------------------------------------------------------
def perceptual_loss(x, y, *, reduction="mean", img_weight=1.0,
                    use_L1_norm=False, use_pallas=None):
    """Image-space PerceptualLoss forward (feature_weights empty).

    TODO(synk): VGG19 feature terms (PretrainedVGG19FeatureExtractor +
                mean_var_dict normalization) need pretrained weights from disk
                and are not translated.
    TODO(synk): reduction='pixelwise' (bilinear upsample of a per-pixel loss
                map) and use_relative_error are not implemented.
    """
    assert reduction in ("none", "sum", "mean")
    assert x.ndim == 4 and x.shape == y.shape
    assert img_weight != 0.0
    n, c_in, h, w = x.shape
    assert c_in in (1, 3), "PerceptualLoss expects 1 or 3 input channels"

    # Free reshapes only — no padded copies, no extra HBM traffic.
    x2 = x.reshape(n * c_in, h * w)
    y2 = y.reshape(n * c_in, h * w)

    if use_pallas is None:
        total_in_bytes = 2 * x2.size * jnp.dtype(x2.dtype).itemsize
        use_pallas = total_in_bytes >= (2 << 20)

    if use_pallas:
        row_sums = _rowwise_norm_sum_pallas(x2, y2, use_l1=use_L1_norm)
    else:
        row_sums = _rowwise_norm_sum_jnp(x2, y2, use_l1=use_L1_norm)
    row_sums = row_sums.reshape(n, c_in)

    # Fold preprocessing: p(z) = ((0.5*z + 0.5) - mean_c)/std_c, so
    # p(x) - p(y) = 0.5*(x - y)/std_c  ->  per-channel weights.
    if use_L1_norm:
        w_c = 0.5 / VGG19_STD
    else:
        w_c = 0.25 / (VGG19_STD ** 2)

    if c_in == 3:
        per_sample = jnp.sum(row_sums * w_c[None, :], axis=1)
    else:  # single channel expanded to 3 identical channels
        per_sample = row_sums[:, 0] * jnp.sum(w_c)
    per_sample = per_sample / (3.0 * h * w)

    # loss = img_weight * per_sample / (img_weight + sum(feature_weights)=0)
    loss = per_sample
    if reduction == "none":
        return loss
    if reduction == "mean":
        return jnp.mean(loss)
    return jnp.sum(loss)


# ----------------------------------------------------------------------------
# Pure-JAX reference (mirrors the PyTorch forward, image path)
# ----------------------------------------------------------------------------
def _ref_perceptual_loss(x, y, reduction, use_L1_norm=False):
    def preprocess(z):
        z = z.astype(jnp.float32)
        if z.shape[1] != 3:
            z = jnp.broadcast_to(z, (z.shape[0], 3, z.shape[2], z.shape[3]))
        z = z * 0.5 + 0.5
        return (z - VGG19_MEAN.reshape(1, 3, 1, 1)) / VGG19_STD.reshape(1, 3, 1, 1)

    diff = preprocess(x) - preprocess(y)
    val = jnp.abs(diff) if use_L1_norm else diff * diff
    loss = val.mean(axis=(1, 2, 3))
    if reduction == "none":
        return loss
    if reduction == "mean":
        return loss.mean()
    return loss.sum()


if __name__ == "__main__":
    key = jax.random.PRNGKey(0)
    k1, k2, k3, k4, k5, k6 = jax.random.split(key, 6)
    x3 = jax.random.normal(k1, (2, 3, 16, 16), dtype=jnp.float32)
    y3 = jax.random.normal(k2, (2, 3, 16, 16), dtype=jnp.float32)
    x1 = jax.random.normal(k3, (2, 1, 16, 16), dtype=jnp.float32)
    y1 = jax.random.normal(k4, (2, 1, 16, 16), dtype=jnp.float32)
    # Larger spatial size so the multi-k (reduction-axis) kernel path runs.
    xb = jax.random.normal(k5, (2, 3, 96, 96), dtype=jnp.float32)
    yb = jax.random.normal(k6, (2, 3, 96, 96), dtype=jnp.float32)

    ok = True
    # 3-channel inputs, L2, all reductions — auto path (tiny -> jnp fallback).
    for red in ("none", "mean", "sum"):
        out = jax.block_until_ready(perceptual_loss(x3, y3, reduction=red))
        ref = _ref_perceptual_loss(x3, y3, red)
        ok = ok and bool(jnp.allclose(out, ref, rtol=1e-5, atol=1e-5))
    # Force the Pallas single-k kernel on the small shapes.
    for red in ("none", "mean", "sum"):
        out = jax.block_until_ready(
            perceptual_loss(x3, y3, reduction=red, use_pallas=True))
        ref = _ref_perceptual_loss(x3, y3, red)
        ok = ok and bool(jnp.allclose(out, ref, rtol=1e-5, atol=1e-5))
    # 1-channel inputs (channel-expand path), L2, Pallas path.
    out = jax.block_until_ready(
        perceptual_loss(x1, y1, reduction="mean", use_pallas=True))
    ref = _ref_perceptual_loss(x1, y1, "mean")
    ok = ok and bool(jnp.allclose(out, ref, rtol=1e-5, atol=1e-5))
    # L1 norm variant, Pallas path.
    out = jax.block_until_ready(
        perceptual_loss(x3, y3, reduction="mean", use_L1_norm=True,
                        use_pallas=True))
    ref = _ref_perceptual_loss(x3, y3, "mean", use_L1_norm=True)
    ok = ok and bool(jnp.allclose(out, ref, rtol=1e-5, atol=1e-5))
    # Multi-k reduction kernel (hw > lane tile, exercises tail mask + acc).
    for l1 in (False, True):
        out = jax.block_until_ready(
            perceptual_loss(xb, yb, reduction="mean", use_L1_norm=l1,
                            use_pallas=True))
        ref = _ref_perceptual_loss(xb, yb, "mean", use_L1_norm=l1)
        ok = ok and bool(jnp.allclose(out, ref, rtol=1e-5, atol=1e-5))

    if ok:
        print("KERNEL_OK")
    else:
        print("MISMATCH")
</pallas_src>

<mosaic_0001>
module attributes {stable_mosaic.version = 11 : i64} {
  func.func @_row_norm_sum_kernel_single(%arg0: i32, %arg1: memref<6x256xf32, #tpu.memory_space<vmem>>, %arg2: memref<6x256xf32, #tpu.memory_space<vmem>>, %arg3: memref<6x1xf32, #tpu.memory_space<vmem>>) attributes {dimension_semantics = [#tpu.dimension_semantics<parallel>], iteration_bounds = array<i64: 1>, scalar_prefetch = 0 : i64, scratch_operands = 0 : i64, tpu.core_type = #tpu.core_type<tc>, window_params = [{transform_indices = @transform_0, window_bounds = array<i64: 6, 256>}, {transform_indices = @transform_1, window_bounds = array<i64: 6, 256>}, {transform_indices = @transform_2, window_bounds = array<i64: 6, 1>}]} {
    %c0 = arith.constant 0 : index
    %c0_0 = arith.constant 0 : index
    %0 = vector.load %arg1[%c0, %c0_0] : memref<6x256xf32, #tpu.memory_space<vmem>>, vector<6x256xf32>
    %c0_1 = arith.constant 0 : index
    %c0_2 = arith.constant 0 : index
    %1 = vector.load %arg2[%c0_1, %c0_2] : memref<6x256xf32, #tpu.memory_space<vmem>>, vector<6x256xf32>
    %2 = arith.subf %0, %1 : vector<6x256xf32>
    %3 = arith.mulf %2, %2 : vector<6x256xf32>
    %cst = arith.constant dense<0.000000e+00> : vector<6xf32>
    %4 = vector.multi_reduction <add>, %3, %cst [1] : vector<6x256xf32> to vector<6xf32>
    %5 = vector.shape_cast %4 : vector<6xf32> to vector<6x1xf32>
    %c0_3 = arith.constant 0 : index
    %c0_4 = arith.constant 0 : index
    %6 = vector.load %arg3[%c0_3, %c0_4] : memref<6x1xf32, #tpu.memory_space<vmem>>, vector<6x1xf32>
    tpu.vector_store %arg3[%c0_3, %c0_4], %5 {strides = array<i32>} : memref<6x1xf32, #tpu.memory_space<vmem>>, vector<6x1xf32>,
    return
  }
  func.func @transform_0(%arg0: i32) -> (i32, i32) {
    %c0_i32 = arith.constant 0 : i32
    %c0_i32_0 = arith.constant 0 : i32
    return %arg0, %c0_i32 : i32, i32
  }
  func.func @transform_1(%arg0: i32) -> (i32, i32) {
    %c0_i32 = arith.constant 0 : i32
    %c0_i32_0 = arith.constant 0 : i32
    return %arg0, %c0_i32 : i32, i32
  }
  func.func @transform_2(%arg0: i32) -> (i32, i32) {
    %c0_i32 = arith.constant 0 : i32
    %c0_i32_0 = arith.constant 0 : i32
    return %arg0, %c0_i32 : i32, i32
  }
}

</mosaic_0001>

<llo_original>
// kernel: tpu_custom_call.1
$region0: #{tpu_custom_call.1}
  #allocation0 [shape = 'u32[]', space=smem, size = 0x4, offset = 0x4, fixed_abs, tag = 'smem constant byte address 0x4 - core index']
  #allocation1 [shape = 'u32[144,128]{1,0:T(1,128)}', space=vmem, size = 0x12000, scoped, tag = 'internal scratch']
  %s0 = inlined_call_operand.hbm [shape: f32[6,256], index: 0, kind: input, shape index: {}]
  %s1 = inlined_call_operand.hbm [shape: f32[6,256], index: 1, kind: input, shape index: {}]
  %s2 = inlined_call_operand.vmem [shape: f32[6,1], index: 2, kind: output, shape index: {}]
  %s3 = sld [smem:[#allocation0]]
  $region26: #{tpu_custom_call.1} parent=0
    _
  %s5 = ssub.s32 1, %s3
  %s6 = scalar_select 0, %s5, %s3
  $region1: #{tpu_custom_call.1} parent=0
    #allocation2 [shape = 'u8[8192]{0}', space=vmem, size = 0x2000, scoped, tag = 'input window, operand 0, single buffered']
    #allocation3 [shape = 's32[1]{0}', space=sflag, size = 0x4, scoped, tag = 'scoped memory for tpu_custom_call.1']
    #allocation4 [shape = 'u8[8192]{0}', space=vmem, size = 0x2000, scoped, tag = 'input window, operand 1, single buffered']
    #allocation5 [shape = 's32[1]{0}', space=sflag, size = 0x4, scoped, tag = 'scoped memory for tpu_custom_call.1']
    %7 = vsyncpa [#allocation3], 0
    %8 = vsyncpa [#allocation5], 0
    // Predicated region
    $region2: #{tpu_custom_call.1} parent=1 // pred_check
      _
    $region3: #{tpu_custom_call.1} parent=1 // pred_check_branch
      %10 = sbr.rel (0) target = $region5
    $region4: #{tpu_custom_call.1} parent=1 // pred_region
      %s12 = ssub.s32 256, 256
      %13 = vsyncadd [#allocation3], %s12
      %s15 = sshll.u32 [#allocation2], 4
      %s16 = int_to_ptr.vmem [resolvable:$true] %s15
      %18 = dma.hbm_to_vmem [thread:$0]  %s0, 256, %s16, [#allocation3]
    $region5: #{tpu_custom_call.1} parent=1 // pred_fallthru
      _
    // Predicated region
    $region6: #{tpu_custom_call.1} parent=1 // pred_check
      _
    $region7: #{tpu_custom_call.1} parent=1 // pred_check_branch
      %20 = sbr.rel (0) target = $region9
    $region8: #{tpu_custom_call.1} parent=1 // pred_region
      %s22 = ssub.s32 256, 256
      %23 = vsyncadd [#allocation5], %s22
      %s25 = sshll.u32 [#allocation4], 4
      %s26 = int_to_ptr.vmem [resolvable:$true] %s25
      %28 = dma.hbm_to_vmem [thread:$0]  %s1, 256, %s26, [#allocation5]
    $region9: #{tpu_custom_call.1} parent=1 // pred_fallthru
      _
    // Predicated region
    $region10: #{tpu_custom_call.1} parent=1 // pred_check
      _
    $region11: #{tpu_custom_call.1} parent=1 // pred_check_branch
      %30 = sbr.rel (0) target = $region13
    $region12: #{tpu_custom_call.1} parent=1 // pred_region
      %31 = dma.done [#allocation3], 256
    $region13: #{tpu_custom_call.1} parent=1 // pred_fallthru
      _
    // Predicated region
    $region14: #{tpu_custom_call.1} parent=1 // pred_check
      _
    $region15: #{tpu_custom_call.1} parent=1 // pred_check_branch
      %33 = sbr.rel (0) target = $region17
    $region16: #{tpu_custom_call.1} parent=1 // pred_region
      %34 = dma.done [#allocation5], 256
    $region17: #{tpu_custom_call.1} parent=1 // pred_fallthru
      _
    %v35 = vld [vmem:[#allocation2] sm:$0x3f]
    %v36 = vld [vmem:[#allocation2 + $0x8] sm:$0x3f]
    %v37 = vld [vmem:[#allocation4] sm:$0x3f]
    %v38 = vld [vmem:[#allocation4 + $0x8] sm:$0x3f]
    %v39 = vsub.f32 %v35, %v37
    %v40 = vsub.f32 %v36, %v38
    %v41 = vmul.f32 %v39, %v39
    %v42 = vmul.f32 %v40, %v40
    %vm43 = vcmask 1045504
    %v44 = vsel %vm43, %v41, 0.0
    %v45 = vsel %vm43, %v42, 0.0
    %v46 = vadd.f32 %v44, %v45
    %47 = vadd.xlane.f32.xlu0 %v46
    %v48 = vpop.xlane.xlu0 %47
    %vm49 = vcmask 5120
    %50 = vst.msk [vmem:[%s2] sm:$0x3f] %vm49, %v48
    // Predicated region
    $region18: #{tpu_custom_call.1} parent=1 // pred_check
      _
    $region19: #{tpu_custom_call.1} parent=1 // pred_check_branch
      %52 = sbr.rel (0) target = $region21
    $region20: #{tpu_custom_call.1} parent=1 // pred_region
      _
    $region21: #{tpu_custom_call.1} parent=1 // pred_fallthru
      _
    // Predicated region
    $region22: #{tpu_custom_call.1} parent=1 // pred_check
      _
    $region23: #{tpu_custom_call.1} parent=1 // pred_check_branch
      %54 = sbr.rel (0) target = $region25
    $region24: #{tpu_custom_call.1} parent=1 // pred_region
      _
    $region25: #{tpu_custom_call.1} parent=1 // pred_fallthru
      _
    %55 = vsyncpa [#allocation3], 1
    %56 = vsyncpa [#allocation5], 1

</llo_original>
